<compile_context>
chip_gen: v7x
topology: tpu7x:2x2x1
jax: 0.10.0
libtpu: 0.0.40
codegen_flags: <defaults>
</compile_context>

<pallas_src>
import functools

import jax
import jax.numpy as jnp
from jax.experimental import pallas as pl
from jax.experimental.pallas import tpu as pltpu


def _lstm_model_kernel(
    inputs_ref,            # (S, B, I)    f32
    enc_w_ref,             # (I+H, 4H)    f32   [W_ih; W_hh] stacked (dead path only)
    enc_b_ref,             # (1, 4H)      f32   b_ih + b_hh
    dec_wih_ref,           # (I, 4H)      f32   decoder input->hidden (step 0 only)
    dec_b_ref,             # (1, 4H)      f32   b_ih + b_hh
    wcomb_ref,             # (H, 4H)      f32   W_lin @ W_ih + W_hh   (steps >= 1)
    bcomb_ref,             # (1, 4H)      f32   b_lin @ W_ih + b      (steps >= 1)
    lin_w_ref,             # (H, O)       f32
    lin_b_ref,             # (1, O)       f32
    out_ref,               # (T*B, O)     f32
    *,
    seq_len: int,
    dec_len: int,
    d_hid: int,
    run_dead_encoder: bool,
):
    f32 = jnp.float32
    B = inputs_ref.shape[1]
    H = d_hid
    O = lin_w_ref.shape[1]

    def gate_update(gates, c):
        # Two full-width EUP passes instead of four narrow per-gate ones.
        sig = jax.nn.sigmoid(gates)
        th = jnp.tanh(gates)
        i = sig[:, 0 * H:1 * H]
        f = sig[:, 1 * H:2 * H]
        g = th[:, 2 * H:3 * H]
        o = sig[:, 3 * H:4 * H]
        c_new = f * c + i * g
        h_new = o * jnp.tanh(c_new)
        return h_new, c_new

    # ---- encode(inputs): the reference discards this state via reset_state()
    # before decoding, so it is dead compute; replay only if explicitly asked.
    if run_dead_encoder:
        enc_w = enc_w_ref[...]                                    # hoisted
        enc_b = jnp.broadcast_to(enc_b_ref[...], (B, 4 * H))      # hoisted
        h = jnp.zeros((B, H), f32)
        c = jnp.zeros((B, H), f32)
        for t in range(seq_len):          # fully unrolled, static indices
            xh = jnp.concatenate([inputs_ref[t], h], axis=1)
            gates = jnp.dot(xh, enc_w, preferred_element_type=f32) + enc_b
            h, c = gate_update(gates, c)
        # reset_state(): encoder state intentionally unused from here on.

    # ---- decoder step 0: zero state, fed inputs[-1] -------------------------
    dec_b = jnp.broadcast_to(dec_b_ref[...], (B, 4 * H))          # hoisted
    x0 = inputs_ref[seq_len - 1]                                  # (B, I), I == O
    gates0 = jnp.dot(x0, dec_wih_ref[...], preferred_element_type=f32) + dec_b
    sig = jax.nn.sigmoid(gates0)
    th = jnp.tanh(gates0)
    c = sig[:, 0 * H:1 * H] * th[:, 2 * H:3 * H]   # f * c_prev term is zero (c_prev = 0)
    h = sig[:, 3 * H:4 * H] * jnp.tanh(c)
    hs = [h]

    # ---- decoder steps 1..T-1: Linear feedback folded into input transform --
    wcomb = wcomb_ref[...]                                        # hoisted
    bcomb = jnp.broadcast_to(bcomb_ref[...], (B, 4 * H))          # hoisted
    for _ in range(1, dec_len):           # fully unrolled; one MXU push per step
        gates = jnp.dot(h, wcomb, preferred_element_type=f32) + bcomb
        h, c = gate_update(gates, c)
        hs.append(h)

    # ---- all T Linear projections as one batched matmul + single store ------
    h_all = jnp.concatenate(hs, axis=0)                           # (T*B, H)
    lin_b = jnp.broadcast_to(lin_b_ref[...], (dec_len * B, O))
    y_all = jnp.dot(h_all, lin_w_ref[...], preferred_element_type=f32) + lin_b
    out_ref[...] = y_all.astype(out_ref.dtype)


def lstm_model_forward(inputs, params, dec_seq_len, *, run_dead_encoder=False):
    """Pallas equivalent of LSTMModel.forward(inputs, dec_seq_len)."""
    S, B, I = inputs.shape
    H = params["enc_whh_t"].shape[0]
    O = params["lin_w_t"].shape[1]
    assert I == O, "reference model only runs when input_size == output_size"
    assert dec_seq_len >= 1

    f32 = jnp.float32
    # Encoder weights pre-stacked [W_ih; W_hh] (wrapper-side, free).
    enc_w = jnp.concatenate(
        [params["enc_wih_t"], params["enc_whh_t"]], axis=0).astype(f32)
    # Autoregressive-feedback fusion (wrapper-side, one-time):
    #   gates_{t+1} = h_t @ (W_lin @ W_ih + W_hh) + (b_lin @ W_ih + b)
    w_comb = params["lin_w_t"] @ params["dec_wih_t"] + params["dec_whh_t"]
    b_comb = params["lin_b"] @ params["dec_wih_t"] + params["dec_b"]

    kernel = functools.partial(
        _lstm_model_kernel,
        seq_len=S, dec_len=dec_seq_len, d_hid=H,
        run_dead_encoder=run_dead_encoder,
    )
    vmem = pl.BlockSpec(memory_space=pltpu.MemorySpace.VMEM)
    out_flat = pl.pallas_call(
        kernel,
        out_shape=jax.ShapeDtypeStruct((dec_seq_len * B, O), jnp.float32),
        in_specs=[vmem] * 9,
        out_specs=vmem,
    )(inputs.astype(f32), enc_w, params["enc_b"],
      params["dec_wih_t"].astype(f32), params["dec_b"],
      w_comb.astype(f32), b_comb.astype(f32),
      params["lin_w_t"].astype(f32), params["lin_b"])
    return out_flat.reshape(dec_seq_len, B, O)


# ------------------------- pure-JAX (f32) reference -------------------------
def _ref_cell(x, h, c, wih_t, whh_t, b):
    H = h.shape[1]
    gates = x @ wih_t + h @ whh_t + b
    i = jax.nn.sigmoid(gates[:, 0 * H:1 * H])
    f = jax.nn.sigmoid(gates[:, 1 * H:2 * H])
    g = jnp.tanh(gates[:, 2 * H:3 * H])
    o = jax.nn.sigmoid(gates[:, 3 * H:4 * H])
    c_new = f * c + i * g
    return o * jnp.tanh(c_new), c_new


def lstm_model_reference(inputs, params, dec_seq_len):
    S, B, I = inputs.shape
    H = params["enc_whh_t"].shape[0]
    h = jnp.zeros((B, H), jnp.float32)
    c = jnp.zeros((B, H), jnp.float32)
    for t in range(S):  # encode (state then discarded, as in the reference)
        h, c = _ref_cell(inputs[t], h, c,
                         params["enc_wih_t"], params["enc_whh_t"], params["enc_b"])
    h = jnp.zeros((B, H), jnp.float32)   # reset_state()
    c = jnp.zeros((B, H), jnp.float32)
    x = inputs[-1]
    outs = []
    for _ in range(dec_seq_len):
        h, c = _ref_cell(x, h, c,
                         params["dec_wih_t"], params["dec_whh_t"], params["dec_b"])
        y = h @ params["lin_w_t"] + params["lin_b"]
        outs.append(y)
        x = y
    return jnp.stack(outs)


# ------------------------- deterministic params ------------------------------
def init_params(key, input_size, output_size, d_hid):
    k = 1.0 / jnp.sqrt(jnp.float32(d_hid))
    keys = jax.random.split(key, 10)

    def u(kk, shape):
        return jax.random.uniform(kk, shape, jnp.float32, -k, k)

    H = d_hid
    return {
        # encoder LSTMCell(input_size, d_hid): weights stored transposed
        "enc_wih_t": u(keys[0], (input_size, 4 * H)),
        "enc_whh_t": u(keys[1], (H, 4 * H)),
        "enc_b":     (u(keys[2], (1, 4 * H)) + u(keys[3], (1, 4 * H))),  # b_ih + b_hh
        # decoder LSTMCell(output_size, d_hid)
        "dec_wih_t": u(keys[4], (output_size, 4 * H)),
        "dec_whh_t": u(keys[5], (H, 4 * H)),
        "dec_b":     (u(keys[6], (1, 4 * H)) + u(keys[7], (1, 4 * H))),
        # Linear(d_hid, output_size)
        "lin_w_t":   u(keys[8], (H, output_size)),
        "lin_b":     u(keys[9], (1, output_size)),
    }


if __name__ == "__main__":
    input_size = 16
    output_size = 16          # must equal input_size (see reference forward)
    d_hid = 32
    batch = 2
    enc_seq_len = 8
    dec_seq_len = 4

    root = jax.random.PRNGKey(0)
    k_in, k_par = jax.random.split(root)
    inputs = jax.random.normal(k_in, (enc_seq_len, batch, input_size), jnp.float32)
    params = init_params(k_par, input_size, output_size, d_hid)

    # Default (fast) variant: dead encoder pass skipped.
    run = jax.jit(functools.partial(lstm_model_forward, dec_seq_len=dec_seq_len))
    out = jax.block_until_ready(run(inputs, params))

    # Step-for-step faithful variant: replays the (discarded) encoder pass.
    run_faithful = jax.jit(functools.partial(
        lstm_model_forward, dec_seq_len=dec_seq_len, run_dead_encoder=True))
    out_faithful = jax.block_until_ready(run_faithful(inputs, params))

    ref = lstm_model_reference(inputs, params, dec_seq_len)
    assert out.shape == (dec_seq_len, batch, output_size)
    assert jnp.allclose(out, ref, atol=3e-2, rtol=3e-2), "mismatch vs JAX reference"
    assert jnp.allclose(out_faithful, ref, atol=3e-2, rtol=3e-2), \
        "faithful variant mismatch vs JAX reference"
    assert jnp.allclose(out, out_faithful, atol=1e-5, rtol=1e-5), \
        "skipping the dead encoder pass changed the output"

    print("KERNEL_OK")
</pallas_src>

<mosaic_0001>
module attributes {stable_mosaic.version = 11 : i64} {
  func.func @_lstm_model_kernel(%arg0: memref<8x2x16xf32, #tpu.memory_space<vmem>>, %arg1: memref<48x128xf32, #tpu.memory_space<vmem>>, %arg2: memref<1x128xf32, #tpu.memory_space<vmem>>, %arg3: memref<16x128xf32, #tpu.memory_space<vmem>>, %arg4: memref<1x128xf32, #tpu.memory_space<vmem>>, %arg5: memref<32x128xf32, #tpu.memory_space<vmem>>, %arg6: memref<1x128xf32, #tpu.memory_space<vmem>>, %arg7: memref<32x16xf32, #tpu.memory_space<vmem>>, %arg8: memref<1x16xf32, #tpu.memory_space<vmem>>, %arg9: memref<8x16xf32, #tpu.memory_space<vmem>>) attributes {dimension_semantics = [], scalar_prefetch = 0 : i64, scratch_operands = 0 : i64, tpu.core_type = #tpu.core_type<tc>} {
    %c0 = arith.constant 0 : index
    %c0_0 = arith.constant 0 : index
    %0 = vector.load %arg4[%c0, %c0_0] : memref<1x128xf32, #tpu.memory_space<vmem>>, vector<1x128xf32>
    %1 = vector.shape_cast %0 : vector<1x128xf32> to vector<1x128xf32>
    %2 = vector.broadcast %1 : vector<1x128xf32> to vector<2x128xf32>
    %c7 = arith.constant 7 : index
    %c0_1 = arith.constant 0 : index
    %c0_2 = arith.constant 0 : index
    %3 = vector.load %arg0[%c7, %c0_1, %c0_2] : memref<8x2x16xf32, #tpu.memory_space<vmem>>, vector<1x2x16xf32>
    %4 = vector.shape_cast %3 : vector<1x2x16xf32> to vector<2x16xf32>
    %c0_3 = arith.constant 0 : index
    %c0_4 = arith.constant 0 : index
    %5 = vector.load %arg3[%c0_3, %c0_4] : memref<16x128xf32, #tpu.memory_space<vmem>>, vector<16x128xf32>
    %cst = arith.constant dense<0.000000e+00> : vector<2x128xf32>
    %6 = tpu.matmul %4, %5, %cst {dimension_numbers = #tpu.dot_dimension_numbers<[1], [0], [0], [1], [0, 0, 1, 1], [], []>} : vector<2x16xf32>, vector<16x128xf32>, vector<2x128xf32> -> vector<2x128xf32>
    %7 = arith.addf %6, %2 : vector<2x128xf32>
    %8 = arith.negf %7 : vector<2x128xf32>
    %9 = math.exp %8 : vector<2x128xf32>
    %cst_5 = arith.constant 1.000000e+00 : f32
    %10 = vector.broadcast %cst_5 : f32 to vector<2x128xf32>
    %11 = arith.addf %10, %9 : vector<2x128xf32>
    %12 = arith.divf %10, %11 : vector<2x128xf32>
    %13 = math.tanh %7 : vector<2x128xf32>
    %14 = vector.extract_strided_slice %12 {offsets = [0, 0], sizes = [2, 32], strides = [1, 1]} : vector<2x128xf32> to vector<2x32xf32>
    %15 = vector.extract_strided_slice %13 {offsets = [0, 64], sizes = [2, 32], strides = [1, 1]} : vector<2x128xf32> to vector<2x32xf32>
    %16 = arith.mulf %14, %15 : vector<2x32xf32>
    %17 = vector.extract_strided_slice %12 {offsets = [0, 96], sizes = [2, 32], strides = [1, 1]} : vector<2x128xf32> to vector<2x32xf32>
    %18 = math.tanh %16 : vector<2x32xf32>
    %19 = arith.mulf %17, %18 : vector<2x32xf32>
    %c0_6 = arith.constant 0 : index
    %c0_7 = arith.constant 0 : index
    %20 = vector.load %arg5[%c0_6, %c0_7] : memref<32x128xf32, #tpu.memory_space<vmem>>, vector<32x128xf32>
    %c0_8 = arith.constant 0 : index
    %c0_9 = arith.constant 0 : index
    %21 = vector.load %arg6[%c0_8, %c0_9] : memref<1x128xf32, #tpu.memory_space<vmem>>, vector<1x128xf32>
    %22 = vector.shape_cast %21 : vector<1x128xf32> to vector<1x128xf32>
    %23 = vector.broadcast %22 : vector<1x128xf32> to vector<2x128xf32>
    %cst_10 = arith.constant dense<0.000000e+00> : vector<2x128xf32>
    %24 = tpu.matmul %19, %20, %cst_10 {dimension_numbers = #tpu.dot_dimension_numbers<[1], [0], [0], [1], [0, 0, 1, 1], [], []>} : vector<2x32xf32>, vector<32x128xf32>, vector<2x128xf32> -> vector<2x128xf32>
    %25 = arith.addf %24, %23 : vector<2x128xf32>
    %26 = arith.negf %25 : vector<2x128xf32>
    %27 = math.exp %26 : vector<2x128xf32>
    %cst_11 = arith.constant 1.000000e+00 : f32
    %28 = vector.broadcast %cst_11 : f32 to vector<2x128xf32>
    %29 = arith.addf %28, %27 : vector<2x128xf32>
    %30 = arith.divf %28, %29 : vector<2x128xf32>
    %31 = math.tanh %25 : vector<2x128xf32>
    %32 = vector.extract_strided_slice %30 {offsets = [0, 0], sizes = [2, 32], strides = [1, 1]} : vector<2x128xf32> to vector<2x32xf32>
    %33 = vector.extract_strided_slice %30 {offsets = [0, 32], sizes = [2, 32], strides = [1, 1]} : vector<2x128xf32> to vector<2x32xf32>
    %34 = vector.extract_strided_slice %31 {offsets = [0, 64], sizes = [2, 32], strides = [1, 1]} : vector<2x128xf32> to vector<2x32xf32>
    %35 = vector.extract_strided_slice %30 {offsets = [0, 96], sizes = [2, 32], strides = [1, 1]} : vector<2x128xf32> to vector<2x32xf32>
    %36 = arith.mulf %33, %16 : vector<2x32xf32>
    %37 = arith.mulf %32, %34 : vector<2x32xf32>
    %38 = arith.addf %36, %37 : vector<2x32xf32>
    %39 = math.tanh %38 : vector<2x32xf32>
    %40 = arith.mulf %35, %39 : vector<2x32xf32>
    %cst_12 = arith.constant dense<0.000000e+00> : vector<2x128xf32>
    %41 = tpu.matmul %40, %20, %cst_12 {dimension_numbers = #tpu.dot_dimension_numbers<[1], [0], [0], [1], [0, 0, 1, 1], [], []>} : vector<2x32xf32>, vector<32x128xf32>, vector<2x128xf32> -> vector<2x128xf32>
    %42 = arith.addf %41, %23 : vector<2x128xf32>
    %43 = arith.negf %42 : vector<2x128xf32>
    %44 = math.exp %43 : vector<2x128xf32>
    %cst_13 = arith.constant 1.000000e+00 : f32
    %45 = vector.broadcast %cst_13 : f32 to vector<2x128xf32>
    %46 = arith.addf %45, %44 : vector<2x128xf32>
    %47 = arith.divf %45, %46 : vector<2x128xf32>
    %48 = math.tanh %42 : vector<2x128xf32>
    %49 = vector.extract_strided_slice %47 {offsets = [0, 0], sizes = [2, 32], strides = [1, 1]} : vector<2x128xf32> to vector<2x32xf32>
    %50 = vector.extract_strided_slice %47 {offsets = [0, 32], sizes = [2, 32], strides = [1, 1]} : vector<2x128xf32> to vector<2x32xf32>
    %51 = vector.extract_strided_slice %48 {offsets = [0, 64], sizes = [2, 32], strides = [1, 1]} : vector<2x128xf32> to vector<2x32xf32>
    %52 = vector.extract_strided_slice %47 {offsets = [0, 96], sizes = [2, 32], strides = [1, 1]} : vector<2x128xf32> to vector<2x32xf32>
    %53 = arith.mulf %50, %38 : vector<2x32xf32>
    %54 = arith.mulf %49, %51 : vector<2x32xf32>
    %55 = arith.addf %53, %54 : vector<2x32xf32>
    %56 = math.tanh %55 : vector<2x32xf32>
    %57 = arith.mulf %52, %56 : vector<2x32xf32>
    %cst_14 = arith.constant dense<0.000000e+00> : vector<2x128xf32>
    %58 = tpu.matmul %57, %20, %cst_14 {dimension_numbers = #tpu.dot_dimension_numbers<[1], [0], [0], [1], [0, 0, 1, 1], [], []>} : vector<2x32xf32>, vector<32x128xf32>, vector<2x128xf32> -> vector<2x128xf32>
    %59 = arith.addf %58, %23 : vector<2x128xf32>
    %60 = arith.negf %59 : vector<2x128xf32>
    %61 = math.exp %60 : vector<2x128xf32>
    %cst_15 = arith.constant 1.000000e+00 : f32
    %62 = vector.broadcast %cst_15 : f32 to vector<2x128xf32>
    %63 = arith.addf %62, %61 : vector<2x128xf32>
    %64 = arith.divf %62, %63 : vector<2x128xf32>
    %65 = math.tanh %59 : vector<2x128xf32>
    %66 = vector.extract_strided_slice %64 {offsets = [0, 0], sizes = [2, 32], strides = [1, 1]} : vector<2x128xf32> to vector<2x32xf32>
    %67 = vector.extract_strided_slice %64 {offsets = [0, 32], sizes = [2, 32], strides = [1, 1]} : vector<2x128xf32> to vector<2x32xf32>
    %68 = vector.extract_strided_slice %65 {offsets = [0, 64], sizes = [2, 32], strides = [1, 1]} : vector<2x128xf32> to vector<2x32xf32>
    %69 = vector.extract_strided_slice %64 {offsets = [0, 96], sizes = [2, 32], strides = [1, 1]} : vector<2x128xf32> to vector<2x32xf32>
    %70 = arith.mulf %67, %55 : vector<2x32xf32>
    %71 = arith.mulf %66, %68 : vector<2x32xf32>
    %72 = arith.addf %70, %71 : vector<2x32xf32>
    %73 = math.tanh %72 : vector<2x32xf32>
    %74 = arith.mulf %69, %73 : vector<2x32xf32>
    %75 = tpu.concatenate %19, %40, %57, %74 in 0 : vector<2x32xf32>, vector<2x32xf32>, vector<2x32xf32>, vector<2x32xf32> -> vector<8x32xf32>
    %c0_16 = arith.constant 0 : index
    %c0_17 = arith.constant 0 : index
    %76 = vector.load %arg8[%c0_16, %c0_17] : memref<1x16xf32, #tpu.memory_space<vmem>>, vector<1x16xf32>
    %77 = vector.shape_cast %76 : vector<1x16xf32> to vector<1x16xf32>
    %78 = vector.broadcast %77 : vector<1x16xf32> to vector<8x16xf32>
    %c0_18 = arith.constant 0 : index
    %c0_19 = arith.constant 0 : index
    %79 = vector.load %arg7[%c0_18, %c0_19] : memref<32x16xf32, #tpu.memory_space<vmem>>, vector<32x16xf32>
    %cst_20 = arith.constant dense<0.000000e+00> : vector<8x16xf32>
    %80 = tpu.matmul %75, %79, %cst_20 {dimension_numbers = #tpu.dot_dimension_numbers<[1], [0], [0], [1], [0, 0, 1, 1], [], []>} : vector<8x32xf32>, vector<32x16xf32>, vector<8x16xf32> -> vector<8x16xf32>
    %81 = arith.addf %80, %78 : vector<8x16xf32>
    %c0_21 = arith.constant 0 : index
    %c0_22 = arith.constant 0 : index
    %82 = vector.load %arg9[%c0_21, %c0_22] : memref<8x16xf32, #tpu.memory_space<vmem>>, vector<8x16xf32>
    tpu.vector_store %arg9[%c0_21, %c0_22], %81 {strides = array<i32>} : memref<8x16xf32, #tpu.memory_space<vmem>>, vector<8x16xf32>,
    return
  }
}

</mosaic_0001>

<llo_original>
// kernel: lstm_model_forward.1
$region0: #{lstm_model_forward.1}
  #allocation0 [shape = 'u32[]', space=smem, size = 0x4, offset = 0x4, fixed_abs, tag = 'smem constant byte address 0x4 - core index']
  #allocation1 [shape = 'u32[144,128]{1,0:T(1,128)}', space=vmem, size = 0x12000, scoped, tag = 'internal scratch']
  %s0 = inlined_call_operand.vmem [shape: f32[8,2,16], index: 0, kind: input, shape index: {}]
  %s1 = inlined_call_operand.vmem [shape: f32[48,128], index: 1, kind: input, shape index: {}]
  %s2 = inlined_call_operand.vmem [shape: f32[1,128], index: 2, kind: input, shape index: {}]
  %s3 = inlined_call_operand.vmem [shape: f32[16,128], index: 3, kind: input, shape index: {}]
  %s4 = inlined_call_operand.vmem [shape: f32[1,128], index: 4, kind: input, shape index: {}]
  %s5 = inlined_call_operand.vmem [shape: f32[32,128], index: 5, kind: input, shape index: {}]
  %s6 = inlined_call_operand.vmem [shape: f32[1,128], index: 6, kind: input, shape index: {}]
  %s7 = inlined_call_operand.vmem [shape: f32[32,16], index: 7, kind: input, shape index: {}]
  %s8 = inlined_call_operand.vmem [shape: f32[1,16], index: 8, kind: input, shape index: {}]
  %s9 = inlined_call_operand.hbm [shape: f32[8,16], index: 9, kind: output, shape index: {}]
  %s10 = sld [smem:[#allocation0]]
  $region46: #{lstm_model_forward.1} parent=0
    _
  %s12 = ssub.s32 1, %s10
  %s13 = scalar_select 0, %s12, %s10
  $region1: #{lstm_model_forward.1} parent=0
    #allocation2 [shape = 'u8[4096]{0}', space=vmem, size = 0x1000, scoped, tag = 'output window, operand 0, single buffered']
    #allocation3 [shape = 's32[1]{0}', space=sflag, size = 0x4, scoped, tag = 'scoped memory for lstm_model_forward.1']
    %14 = vsyncpa [#allocation3], 0
    // Predicated region
    $region2: #{lstm_model_forward.1} parent=1 // pred_check
      _
    $region3: #{lstm_model_forward.1} parent=1 // pred_check_branch
      %16 = sbr.rel (0) target = $region5
    $region4: #{lstm_model_forward.1} parent=1 // pred_region
      _
    $region5: #{lstm_model_forward.1} parent=1 // pred_fallthru
      _
    // Predicated region
    $region6: #{lstm_model_forward.1} parent=1 // pred_check
      _
    $region7: #{lstm_model_forward.1} parent=1 // pred_check_branch
      %18 = sbr.rel (0) target = $region9
    $region8: #{lstm_model_forward.1} parent=1 // pred_region
      _
    $region9: #{lstm_model_forward.1} parent=1 // pred_fallthru
      _
    // Predicated region
    $region10: #{lstm_model_forward.1} parent=1 // pred_check
      _
    $region11: #{lstm_model_forward.1} parent=1 // pred_check_branch
      %20 = sbr.rel (0) target = $region13
    $region12: #{lstm_model_forward.1} parent=1 // pred_region
      _
    $region13: #{lstm_model_forward.1} parent=1 // pred_fallthru
      _
    // Predicated region
    $region14: #{lstm_model_forward.1} parent=1 // pred_check
      _
    $region15: #{lstm_model_forward.1} parent=1 // pred_check_branch
      %22 = sbr.rel (0) target = $region17
    $region16: #{lstm_model_forward.1} parent=1 // pred_region
      _
    $region17: #{lstm_model_forward.1} parent=1 // pred_fallthru
      _
    // Predicated region
    $region18: #{lstm_model_forward.1} parent=1 // pred_check
      _
    $region19: #{lstm_model_forward.1} parent=1 // pred_check_branch
      %24 = sbr.rel (0) target = $region21
    $region20: #{lstm_model_forward.1} parent=1 // pred_region
      _
    $region21: #{lstm_model_forward.1} parent=1 // pred_fallthru
      _
    // Predicated region
    $region22: #{lstm_model_forward.1} parent=1 // pred_check
      _
    $region23: #{lstm_model_forward.1} parent=1 // pred_check_branch
      %26 = sbr.rel (0) target = $region25
    $region24: #{lstm_model_forward.1} parent=1 // pred_region
      _
    $region25: #{lstm_model_forward.1} parent=1 // pred_fallthru
      _
    // Predicated region
    $region26: #{lstm_model_forward.1} parent=1 // pred_check
      _
    $region27: #{lstm_model_forward.1} parent=1 // pred_check_branch
      %28 = sbr.rel (0) target = $region29
    $region28: #{lstm_model_forward.1} parent=1 // pred_region
      _
    $region29: #{lstm_model_forward.1} parent=1 // pred_fallthru
      _
    // Predicated region
    $region30: #{lstm_model_forward.1} parent=1 // pred_check
      _
    $region31: #{lstm_model_forward.1} parent=1 // pred_check_branch
      %30 = sbr.rel (0) target = $region33
    $region32: #{lstm_model_forward.1} parent=1 // pred_region
      _
    $region33: #{lstm_model_forward.1} parent=1 // pred_fallthru
      _
    // Predicated region
    $region34: #{lstm_model_forward.1} parent=1 // pred_check
      _
    $region35: #{lstm_model_forward.1} parent=1 // pred_check_branch
      %32 = sbr.rel (0) target = $region37
    $region36: #{lstm_model_forward.1} parent=1 // pred_region
      _
    $region37: #{lstm_model_forward.1} parent=1 // pred_fallthru
      _
    %v33 = vld [vmem:[%s4] sm:$0x1]
    %v35 = vlaneseq
    %v36 = vshrl.u32 %v35, 7
    %v37 = vsub.s32 0, %v36
    %v38 = vrot.slane %v33, %v37
    %s40 = scalar_lea.vmem %s0, 14
    %v41 = vld [vmem:[%s40] sm:$0x3]
    %v42 = vld [vmem:[%s3] sm:$0xff]
    %v43 = vld [vmem:[%s3 + $0x8] sm:$0xff]
    %vm44 = vcmask 130048
    %v46 = vsel %vm44, %v41, 0
    %48 = vmatprep.subr.mxu0 0.0
    %49 = vmatpush1.msra.mxu0 %v42
    %50 = vmatprep.subr.mxu0 0.0
    %51 = vmatpush1.msra.mxu0 %v43
    %52 = vmatprep.subr.mxu0 0.0
    %53 = vmatpush1.msra.mxu0 0.0
    %54 = vmatprep.subr.mxu0 0.0
    %55 = vmatpush1.msra.mxu0 0.0
    %56 = vmatprep.subr.mxu0 0.0
    %57 = vmatpush1.msra.mxu0 0.0
    %58 = vmatprep.subr.mxu0 0.0
    %59 = vmatpush1.msra.mxu0 0.0
    %60 = vmatprep.subr.mxu0 0.0
    %61 = vmatpush1.msra.mxu0 0.0
    %62 = vmatprep.subr.mxu0 0.0
    %63 = vmatpush1.msra.mxu0 0.0
    %64 = vmatprep.subr.mxu0 0.0
    %65 = vmatpush1.msra.mxu0 0.0
    %66 = vmatprep.subr.mxu0 0.0
    %67 = vmatpush1.msra.mxu0 0.0
    %68 = vmatprep.subr.mxu0 0.0
    %69 = vmatpush1.msra.mxu0 0.0
    %70 = vmatprep.subr.mxu0 0.0
    %71 = vmatpush1.msra.mxu0 0.0
    %72 = vmatprep.subr.mxu0 0.0
    %73 = vmatpush1.msra.mxu0 0.0
    %74 = vmatprep.subr.mxu0 0.0
    %75 = vmatpush1.msra.mxu0 0.0
    %76 = vmatprep.subr.mxu0 0.0
    %77 = vmatpush1.msra.mxu0 0.0
    %78 = vmatprep.subr.mxu0 0.0
    %79 = vmatpush1.msra.mxu0 0.0
    %80 = vmatprep.subr.mxu0 0.0
    %81 = vmatpush1.msra.mxu0 0.0
    %82 = vmatprep.subr.mxu0 0.0
    %83 = vmatpush1.msra.mxu0 0.0
    %84 = vmatprep.subr.mxu0 0.0
    %85 = vmatpush1.msra.mxu0 0.0
    %86 = vmatprep.subr.mxu0 0.0
    %87 = vmatpush1.msra.mxu0 0.0
    %88 = vmatprep.subr.mxu0 0.0
    %89 = vmatpush1.msra.mxu0 0.0
    %90 = vmatprep.subr.mxu0 0.0
    %91 = vmatpush1.msra.mxu0 0.0
    %92 = vmatprep.subr.mxu0 0.0
    %93 = vmatpush1.msra.mxu0 0.0
    %94 = vmatprep.subr.mxu0 0.0
    %95 = vmatpush1.msra.mxu0 0.0
    %96 = vmatprep.subr.mxu0 0.0
    %97 = vmatpush1.msra.mxu0 0.0
    %98 = vmatprep.subr.mxu0 0.0
    %99 = vmatpush1.msra.mxu0 0.0
    %100 = vmatprep.subr.mxu0 0.0
    %101 = vmatpush1.msra.mxu0 0.0
    %102 = vmatprep.subr.mxu0 0.0
    %103 = vmatpush1.msra.mxu0 0.0
    %104 = vmatprep.subr.mxu0 0.0
    %105 = vmatpush1.msra.mxu0 0.0
    %106 = vmatprep.subr.mxu0 0.0
    %107 = vmatpush1.msra.mxu0 0.0
    %108 = vmatprep.subr.mxu0 0.0
    %109 = vmatpush1.msra.mxu0 0.0
    %110 = vmatprep.subr.mxu0 0.0
    %111 = vmatpush1.msra.mxu0 0.0
    %112 = vmatprep.mubr.f32.mxu0 0.0
    %113 = vmatmul.mubr.f32.gmra.mrb[0].mxu0 %v46
    %v114 = vpop.f32.mrb[0].mxu0
    %v115 = vadd.f32 %v38, %v114
    %v116 = vpop.f32.mrb[0].mxu0
    %117 = vdwg.mxu0
    %v118 = vxor.u32 %v115, 2147483648
    %v119 = vmul.f32 %v118, 1.442695
    %v120 = vpow.pop %v119
    %v121 = vadd.f32 %v120, 1.0
    %v122 = vrcp.pop %v121
    %v123 = vmul.f32 1.0, %v122
    %v124 = vtanh.pop %v115
    %126 = vrot.lane.b32.xlu0 %v124, 64
    %v127 = vpop.permute.xlu0 %126
    %v129 = vmul.f32 %v123, %v127
    %v130 = vtanh.pop %v129
    %132 = vrot.lane.b32.xlu0 %v130, 96
    %v133 = vpop.permute.xlu0 %132
    %v135 = vmul.f32 %v123, %v133
    %v136 = vld [vmem:[%s5] sm:$0xff]
    %v137 = vld [vmem:[%s5 + $0x8] sm:$0xff]
    %v138 = vld [vmem:[%s5 + $0x10] sm:$0xff]
    %v139 = vld [vmem:[%s5 + $0x18] sm:$0xff]
    %v140 = vld [vmem:[%s6] sm:$0x1]
    %v142 = vlaneseq
    %v143 = vshrl.u32 %v142, 7
    %v144 = vsub.s32 0, %v143
    %v145 = vrot.slane %v140, %v144
    %148 = vrot.lane.b32.xlu0 %v135, 32
    %v149 = vpop.permute.xlu0 %148
    %vm150 = vcmask 261120
    %v151 = vsel %vm150, %v149, 0
    %153 = vmatprep.subr.mxu0 0.0
    %154 = vmatpush1.msra.mxu0 %v136
    %155 = vmatprep.subr.mxu0 0.0
    %156 = vmatpush1.msra.mxu0 %v137
    %157 = vmatprep.subr.mxu0 0.0
    %158 = vmatpush1.msra.mxu0 %v138
    %159 = vmatprep.subr.mxu0 0.0
    %160 = vmatpush1.msra.mxu0 %v139
    %161 = vmatprep.subr.mxu0 0.0
    %162 = vmatpush1.msra.mxu0 0.0
    %163 = vmatprep.subr.mxu0 0.0
    %164 = vmatpush1.msra.mxu0 0.0
    %165 = vmatprep.subr.mxu0 0.0
    %166 = vmatpush1.msra.mxu0 0.0
    %167 = vmatprep.subr.mxu0 0.0
    %168 = vmatpush1.msra.mxu0 0.0
    %169 = vmatprep.subr.mxu0 0.0
    %170 = vmatpush1.msra.mxu0 0.0
    %171 = vmatprep.subr.mxu0 0.0
    %172 = vmatpush1.msra.mxu0 0.0
    %173 = vmatprep.subr.mxu0 0.0
    %174 = vmatpush1.msra.mxu0 0.0
    %175 = vmatprep.subr.mxu0 0.0
    %176 = vmatpush1.msra.mxu0 0.0
    %177 = vmatprep.subr.mxu0 0.0
    %178 = vmatpush1.msra.mxu0 0.0
    %179 = vmatprep.subr.mxu0 0.0
    %180 = vmatpush1.msra.mxu0 0.0
    %181 = vmatprep.subr.mxu0 0.0
    %182 = vmatpush1.msra.mxu0 0.0
    %183 = vmatprep.subr.mxu0 0.0
    %184 = vmatpush1.msra.mxu0 0.0
    %185 = vmatprep.subr.mxu0 0.0
    %186 = vmatpush1.msra.mxu0 0.0
    %187 = vmatprep.subr.mxu0 0.0
    %188 = vmatpush1.msra.mxu0 0.0
    %189 = vmatprep.subr.mxu0 0.0
    %190 = vmatpush1.msra.mxu0 0.0
    %191 = vmatprep.subr.mxu0 0.0
    %192 = vmatpush1.msra.mxu0 0.0
    %193 = vmatprep.subr.mxu0 0.0
    %194 = vmatpush1.msra.mxu0 0.0
    %195 = vmatprep.subr.mxu0 0.0
    %196 = vmatpush1.msra.mxu0 0.0
    %197 = vmatprep.subr.mxu0 0.0
    %198 = vmatpush1.msra.mxu0 0.0
    %199 = vmatprep.subr.mxu0 0.0
    %200 = vmatpush1.msra.mxu0 0.0
    %201 = vmatprep.subr.mxu0 0.0
    %202 = vmatpush1.msra.mxu0 0.0
    %203 = vmatprep.subr.mxu0 0.0
    %204 = vmatpush1.msra.mxu0 0.0
    %205 = vmatprep.subr.mxu0 0.0
    %206 = vmatpush1.msra.mxu0 0.0
    %207 = vmatprep.subr.mxu0 0.0
    %208 = vmatpush1.msra.mxu0 0.0
    %209 = vmatprep.subr.mxu0 0.0
    %210 = vmatpush1.msra.mxu0 0.0
    %211 = vmatprep.subr.mxu0 0.0
    %212 = vmatpush1.msra.mxu0 0.0
    %213 = vmatprep.subr.mxu0 0.0
    %214 = vmatpush1.msra.mxu0 0.0
    %215 = vmatprep.subr.mxu0 0.0
    %216 = vmatpush1.msra.mxu0 0.0
    %217 = vmatprep.mubr.f32.mxu0 0.0
    %218 = vmatmul.mubr.f32.gmra.mrb[0].mxu0 %v151
    %v219 = vpop.f32.mrb[0].mxu0
    %v220 = vadd.f32 %v145, %v219
    %v221 = vpop.f32.mrb[0].mxu0
    %222 = vdwg.mxu0
    %v223 = vxor.u32 %v220, 2147483648
    %v224 = vmul.f32 %v223, 1.442695
    %v225 = vpow.pop %v224
    %v226 = vadd.f32 %v225, 1.0
    %v227 = vrcp.pop %v226
    %v228 = vmul.f32 1.0, %v227
    %v229 = vtanh.pop %v220
    %231 = vrot.lane.b32.xlu0 %v129, 32
    %v232 = vpop.permute.xlu0 %231
    %v234 = vmul.f32 %v228, %v232
    %236 = vrot.lane.b32.xlu0 %v229, 64
    %v237 = vpop.permute.xlu0 %236
    %v239 = vmul.f32 %v228, %v237
    %241 = vrot.lane.b32.xlu0 %v239, 32
    %v242 = vpop.permute.xlu0 %241
    %v244 = vadd.f32 %v234, %v242
    %v245 = vtanh.pop %v244
    %247 = vrot.lane.b32.xlu0 %v245, 64
    %v248 = vpop.permute.xlu0 %247
    %v250 = vmul.f32 %v228, %v248
    %252 = vrot.lane.b32.xlu0 %v250, 32
    %v253 = vpop.permute.xlu0 %252
    %v254 = vsel %vm150, %v253, 0
    %256 = vmatprep.subr.mxu0 0.0
    %257 = vmatpush1.msra.mxu0 %v136
    %258 = vmatprep.subr.mxu0 0.0
    %259 = vmatpush1.msra.mxu0 %v137
    %260 = vmatprep.subr.mxu0 0.0
    %261 = vmatpush1.msra.mxu0 %v138
    %262 = vmatprep.subr.mxu0 0.0
    %263 = vmatpush1.msra.mxu0 %v139
    %264 = vmatprep.subr.mxu0 0.0
    %265 = vmatpush1.msra.mxu0 0.0
    %266 = vmatprep.subr.mxu0 0.0
    %267 = vmatpush1.msra.mxu0 0.0
    %268 = vmatprep.subr.mxu0 0.0
    %269 = vmatpush1.msra.mxu0 0.0
    %270 = vmatprep.subr.mxu0 0.0
    %271 = vmatpush1.msra.mxu0 0.0
    %272 = vmatprep.subr.mxu0 0.0
    %273 = vmatpush1.msra.mxu0 0.0
    %274 = vmatprep.subr.mxu0 0.0
    %275 = vmatpush1.msra.mxu0 0.0
    %276 = vmatprep.subr.mxu0 0.0
    %277 = vmatpush1.msra.mxu0 0.0
    %278 = vmatprep.subr.mxu0 0.0
    %279 = vmatpush1.msra.mxu0 0.0
    %280 = vmatprep.subr.mxu0 0.0
    %281 = vmatpush1.msra.mxu0 0.0
    %282 = vmatprep.subr.mxu0 0.0
    %283 = vmatpush1.msra.mxu0 0.0
    %284 = vmatprep.subr.mxu0 0.0
    %285 = vmatpush1.msra.mxu0 0.0
    %286 = vmatprep.subr.mxu0 0.0
    %287 = vmatpush1.msra.mxu0 0.0
    %288 = vmatprep.subr.mxu0 0.0
    %289 = vmatpush1.msra.mxu0 0.0
    %290 = vmatprep.subr.mxu0 0.0
    %291 = vmatpush1.msra.mxu0 0.0
    %292 = vmatprep.subr.mxu0 0.0
    %293 = vmatpush1.msra.mxu0 0.0
    %294 = vmatprep.subr.mxu0 0.0
    %295 = vmatpush1.msra.mxu0 0.0
    %296 = vmatprep.subr.mxu0 0.0
    %297 = vmatpush1.msra.mxu0 0.0
    %298 = vmatprep.subr.mxu0 0.0
    %299 = vmatpush1.msra.mxu0 0.0
    %300 = vmatprep.subr.mxu0 0.0
    %301 = vmatpush1.msra.mxu0 0.0
    %302 = vmatprep.subr.mxu0 0.0
    %303 = vmatpush1.msra.mxu0 0.0
    %304 = vmatprep.subr.mxu0 0.0
    %305 = vmatpush1.msra.mxu0 0.0
    %306 = vmatprep.subr.mxu0 0.0
    %307 = vmatpush1.msra.mxu0 0.0
    %308 = vmatprep.subr.mxu0 0.0
    %309 = vmatpush1.msra.mxu0 0.0
    %310 = vmatprep.subr.mxu0 0.0
    %311 = vmatpush1.msra.mxu0 0.0
    %312 = vmatprep.subr.mxu0 0.0
    %313 = vmatpush1.msra.mxu0 0.0
    %314 = vmatprep.subr.mxu0 0.0
    %315 = vmatpush1.msra.mxu0 0.0
    %316 = vmatprep.subr.mxu0 0.0
    %317 = vmatpush1.msra.mxu0 0.0
    %318 = vmatprep.subr.mxu0 0.0
    %319 = vmatpush1.msra.mxu0 0.0
    %320 = vmatprep.mubr.f32.mxu0 0.0
    %321 = vmatmul.mubr.f32.gmra.mrb[0].mxu0 %v254
    %v322 = vpop.f32.mrb[0].mxu0
    %v323 = vadd.f32 %v145, %v322
    %v324 = vpop.f32.mrb[0].mxu0
    %325 = vdwg.mxu0
    %v326 = vxor.u32 %v323, 2147483648
    %v327 = vmul.f32 %v326, 1.442695
    %v328 = vpow.pop %v327
    %v329 = vadd.f32 %v328, 1.0
    %v330 = vrcp.pop %v329
    %v331 = vmul.f32 1.0, %v330
    %v332 = vtanh.pop %v323
    %v333 = vmul.f32 %v331, %v244
    %335 = vrot.lane.b32.xlu0 %v332, 64
    %v336 = vpop.permute.xlu0 %335
    %v338 = vmul.f32 %v331, %v336
    %340 = vrot.lane.b32.xlu0 %v338, 32
    %v341 = vpop.permute.xlu0 %340
    %v343 = vadd.f32 %v333, %v341
    %v344 = vtanh.pop %v343
    %346 = vrot.lane.b32.xlu0 %v344, 64
    %v347 = vpop.permute.xlu0 %346
    %v349 = vmul.f32 %v331, %v347
    %351 = vrot.lane.b32.xlu0 %v349, 32
    %v352 = vpop.permute.xlu0 %351
    %v353 = vsel %vm150, %v352, 0
    %355 = vmatprep.subr.mxu0 0.0
    %356 = vmatpush1.msra.mxu0 %v136
    %357 = vmatprep.subr.mxu0 0.0
    %358 = vmatpush1.msra.mxu0 %v137
    %359 = vmatprep.subr.mxu0 0.0
    %360 = vmatpush1.msra.mxu0 %v138
    %361 = vmatprep.subr.mxu0 0.0
    %362 = vmatpush1.msra.mxu0 %v139
    %363 = vmatprep.subr.mxu0 0.0
    %364 = vmatpush1.msra.mxu0 0.0
    %365 = vmatprep.subr.mxu0 0.0
    %366 = vmatpush1.msra.mxu0 0.0
    %367 = vmatprep.subr.mxu0 0.0
    %368 = vmatpush1.msra.mxu0 0.0
    %369 = vmatprep.subr.mxu0 0.0
    %370 = vmatpush1.msra.mxu0 0.0
    %371 = vmatprep.subr.mxu0 0.0
    %372 = vmatpush1.msra.mxu0 0.0
    %373 = vmatprep.subr.mxu0 0.0
    %374 = vmatpush1.msra.mxu0 0.0
    %375 = vmatprep.subr.mxu0 0.0
    %376 = vmatpush1.msra.mxu0 0.0
    %377 = vmatprep.subr.mxu0 0.0
    %378 = vmatpush1.msra.mxu0 0.0
    %379 = vmatprep.subr.mxu0 0.0
    %380 = vmatpush1.msra.mxu0 0.0
    %381 = vmatprep.subr.mxu0 0.0
    %382 = vmatpush1.msra.mxu0 0.0
    %383 = vmatprep.subr.mxu0 0.0
    %384 = vmatpush1.msra.mxu0 0.0
    %385 = vmatprep.subr.mxu0 0.0
    %386 = vmatpush1.msra.mxu0 0.0
    %387 = vmatprep.subr.mxu0 0.0
    %388 = vmatpush1.msra.mxu0 0.0
    %389 = vmatprep.subr.mxu0 0.0
    %390 = vmatpush1.msra.mxu0 0.0
    %391 = vmatprep.subr.mxu0 0.0
    %392 = vmatpush1.msra.mxu0 0.0
    %393 = vmatprep.subr.mxu0 0.0
    %394 = vmatpush1.msra.mxu0 0.0
    %395 = vmatprep.subr.mxu0 0.0
    %396 = vmatpush1.msra.mxu0 0.0
    %397 = vmatprep.subr.mxu0 0.0
    %398 = vmatpush1.msra.mxu0 0.0
    %399 = vmatprep.subr.mxu0 0.0
    %400 = vmatpush1.msra.mxu0 0.0
    %401 = vmatprep.subr.mxu0 0.0
    %402 = vmatpush1.msra.mxu0 0.0
    %403 = vmatprep.subr.mxu0 0.0
    %404 = vmatpush1.msra.mxu0 0.0
    %405 = vmatprep.subr.mxu0 0.0
    %406 = vmatpush1.msra.mxu0 0.0
    %407 = vmatprep.subr.mxu0 0.0
    %408 = vmatpush1.msra.mxu0 0.0
    %409 = vmatprep.subr.mxu0 0.0
    %410 = vmatpush1.msra.mxu0 0.0
    %411 = vmatprep.subr.mxu0 0.0
    %412 = vmatpush1.msra.mxu0 0.0
    %413 = vmatprep.subr.mxu0 0.0
    %414 = vmatpush1.msra.mxu0 0.0
    %415 = vmatprep.subr.mxu0 0.0
    %416 = vmatpush1.msra.mxu0 0.0
    %417 = vmatprep.subr.mxu0 0.0
    %418 = vmatpush1.msra.mxu0 0.0
    %419 = vmatprep.mubr.f32.mxu0 0.0
    %420 = vmatmul.mubr.f32.gmra.mrb[0].mxu0 %v353
    %v421 = vpop.f32.mrb[0].mxu0
    %v422 = vadd.f32 %v145, %v421
    %v423 = vpop.f32.mrb[0].mxu0
    %424 = vdwg.mxu0
    %v425 = vxor.u32 %v422, 2147483648
    %v426 = vmul.f32 %v425, 1.442695
    %v427 = vpow.pop %v426
    %v428 = vadd.f32 %v427, 1.0
    %v429 = vrcp.pop %v428
    %v430 = vmul.f32 1.0, %v429
    %v431 = vtanh.pop %v422
    %v432 = vmul.f32 %v430, %v343
    %434 = vrot.lane.b32.xlu0 %v431, 64
    %v435 = vpop.permute.xlu0 %434
    %v437 = vmul.f32 %v430, %v435
    %439 = vrot.lane.b32.xlu0 %v437, 32
    %v440 = vpop.permute.xlu0 %439
    %v442 = vadd.f32 %v432, %v440
    %v443 = vtanh.pop %v442
    %445 = vrot.lane.b32.xlu0 %v443, 64
    %v446 = vpop.permute.xlu0 %445
    %v448 = vmul.f32 %v430, %v446
    %v449 = vrot.slane %v250, 6
    %v451 = vrot.slane %v349, 4
    %v454 = vrot.slane %v448, 2
    %vm456 = vcmask 1041408
    %v457 = vsel %vm456, %v135, %v449
    %vm458 = vcmask 1043456
    %v459 = vsel %vm458, %v457, %v451
    %vm460 = vcmask 1045504
    %v461 = vsel %vm460, %v459, %v454
    %v462 = vld [vmem:[%s8] sm:$0x1]
    %v464 = vlaneseq
    %v465 = vshrl.u32 %v464, 7
    %v466 = vsub.s32 0, %v465
    %v467 = vrot.slane %v462, %v466
    %v469 = vld [vmem:[%s7] sm:$0xff]
    %v470 = vld [vmem:[%s7 + $0x8] sm:$0xff]
    %v471 = vld [vmem:[%s7 + $0x10] sm:$0xff]
    %v472 = vld [vmem:[%s7 + $0x18] sm:$0xff]
    %474 = vrot.lane.b32.xlu0 %v461, 32
    %v475 = vpop.permute.xlu0 %474
    %v476 = vsel %vm150, %v475, 0
    %478 = vmatprep.subr.mxu0 0.0
    %479 = vmatpush1.msra.mxu0 %v469
    %480 = vmatprep.subr.mxu0 0.0
    %481 = vmatpush1.msra.mxu0 %v470
    %482 = vmatprep.subr.mxu0 0.0
    %483 = vmatpush1.msra.mxu0 %v471
    %484 = vmatprep.subr.mxu0 0.0
    %485 = vmatpush1.msra.mxu0 %v472
    %486 = vmatprep.subr.mxu0 0.0
    %487 = vmatpush1.msra.mxu0 0.0
    %488 = vmatprep.subr.mxu0 0.0
    %489 = vmatpush1.msra.mxu0 0.0
    %490 = vmatprep.subr.mxu0 0.0
    %491 = vmatpush1.msra.mxu0 0.0
    %492 = vmatprep.subr.mxu0 0.0
    %493 = vmatpush1.msra.mxu0 0.0
    %494 = vmatprep.subr.mxu0 0.0
    %495 = vmatpush1.msra.mxu0 0.0
    %496 = vmatprep.subr.mxu0 0.0
    %497 = vmatpush1.msra.mxu0 0.0
    %498 = vmatprep.subr.mxu0 0.0
    %499 = vmatpush1.msra.mxu0 0.0
    %500 = vmatprep.subr.mxu0 0.0
    %501 = vmatpush1.msra.mxu0 0.0
    %502 = vmatprep.subr.mxu0 0.0
    %503 = vmatpush1.msra.mxu0 0.0
    %504 = vmatprep.subr.mxu0 0.0
    %505 = vmatpush1.msra.mxu0 0.0
    %506 = vmatprep.subr.mxu0 0.0
    %507 = vmatpush1.msra.mxu0 0.0
    %508 = vmatprep.subr.mxu0 0.0
    %509 = vmatpush1.msra.mxu0 0.0
    %510 = vmatprep.subr.mxu0 0.0
    %511 = vmatpush1.msra.mxu0 0.0
    %512 = vmatprep.subr.mxu0 0.0
    %513 = vmatpush1.msra.mxu0 0.0
    %514 = vmatprep.subr.mxu0 0.0
    %515 = vmatpush1.msra.mxu0 0.0
    %516 = vmatprep.subr.mxu0 0.0
    %517 = vmatpush1.msra.mxu0 0.0
    %518 = vmatprep.subr.mxu0 0.0
    %519 = vmatpush1.msra.mxu0 0.0
    %520 = vmatprep.subr.mxu0 0.0
    %521 = vmatpush1.msra.mxu0 0.0
    %522 = vmatprep.subr.mxu0 0.0
    %523 = vmatpush1.msra.mxu0 0.0
    %524 = vmatprep.subr.mxu0 0.0
    %525 = vmatpush1.msra.mxu0 0.0
    %526 = vmatprep.subr.mxu0 0.0
    %527 = vmatpush1.msra.mxu0 0.0
    %528 = vmatprep.subr.mxu0 0.0
    %529 = vmatpush1.msra.mxu0 0.0
    %530 = vmatprep.subr.mxu0 0.0
    %531 = vmatpush1.msra.mxu0 0.0
    %532 = vmatprep.subr.mxu0 0.0
    %533 = vmatpush1.msra.mxu0 0.0
    %534 = vmatprep.subr.mxu0 0.0
    %535 = vmatpush1.msra.mxu0 0.0
    %536 = vmatprep.subr.mxu0 0.0
    %537 = vmatpush1.msra.mxu0 0.0
    %538 = vmatprep.subr.mxu0 0.0
    %539 = vmatpush1.msra.mxu0 0.0
    %540 = vmatprep.subr.mxu0 0.0
    %541 = vmatpush1.msra.mxu0 0.0
    %542 = vmatprep.mubr.f32.mxu0 0.0
    %543 = vmatmul.mubr.f32.gmra.mrb[0].mxu0 %v476
    %v544 = vpop.f32.mrb[0].mxu0
    %v545 = vadd.f32 %v467, %v544
    %v546 = vpop.f32.mrb[0].mxu0
    %547 = vdwg.mxu0
    %548 = vst.msk [vmem:[#allocation2] sm:$0xff] %vm44, %v545
    // Predicated region
    $region38: #{lstm_model_forward.1} parent=1 // pred_check
      _
    $region39: #{lstm_model_forward.1} parent=1 // pred_check_branch
      %550 = sbr.rel (0) target = $region41
    $region40: #{lstm_model_forward.1} parent=1 // pred_region
      %s552 = ssub.s32 128, 128
      %553 = vsyncadd [#allocation3], %s552
      %s555 = sshll.u32 [#allocation2], 4
      %s556 = int_to_ptr.vmem [resolvable:$true] %s555
      %558 = dma.vmem_to_hbm [thread:$0]  %s556, 128, %s9, [#allocation3]
    $region41: #{lstm_model_forward.1} parent=1 // pred_fallthru
      _
    // Predicated region
    $region42: #{lstm_model_forward.1} parent=1 // pred_check
      _
    $region43: #{lstm_model_forward.1} parent=1 // pred_check_branch
      %560 = sbr.rel (0) target = $region45
    $region44: #{lstm_model_forward.1} parent=1 // pred_region
      %561 = dma.done [#allocation3], 128
    $region45: #{lstm_model_forward.1} parent=1 // pred_fallthru
      _
    %562 = vsyncpa [#allocation3], 1

</llo_original>
